<compile_context>
chip_gen: v6e
topology: v6e:2x2x1
jax: 0.10.0
libtpu: 0.0.40
codegen_flags: <defaults>
</compile_context>

<pallas_src>
import functools

import jax
import jax.numpy as jnp
from jax.experimental import pallas as pl
from jax.experimental.pallas import tpu as pltpu


def _round_up(n: int, m: int) -> int:
    return pl.cdiv(n, m) * m


def _pick_tiles(M, H, O, x_itemsize, w_itemsize, out_itemsize,
                block_rows=256, block_out=512,
                vmem_budget=48 * 1024 * 1024):
    """Pick (tm, tn) so double-buffered blocks + scratch fit in VMEM."""
    tm = min(block_rows, _round_up(M, 8))
    tn = min(block_out, _round_up(O, 128))

    def vmem_bytes(tm_, tn_):
        xg = 2 * 2 * tm_ * H * x_itemsize       # x + g blocks, double-buffered
        scratch = tm_ * H * w_itemsize          # gated activations (MXU dtype)
        w = 2 * H * tn_ * w_itemsize            # weight column tile, dbl-buf
        b = 2 * tn_ * 4                         # bias column tile
        o = 2 * tm_ * tn_ * out_itemsize        # output tile, dbl-buf
        return xg + scratch + w + b + o

    while tm > 8 and vmem_bytes(tm, tn) > vmem_budget:
        tm = max(8, tm // 2)
    while tn > 128 and vmem_bytes(tm, tn) > vmem_budget:
        tn = max(128, tn // 2)
    return tm, tn


def _fused_rmsnorm_gate_linear_kernel(x_ref, g_ref, nw_ref, lw_ref, lb_ref,
                                      o_ref, y_ref, *, eps):
    # x_ref, g_ref: (tm, H); nw_ref: (1, H); lw_ref: (H, tn); lb_ref: (1, tn)
    # o_ref: (tm, tn); y_ref: VMEM scratch (tm, H) in the MXU operand dtype.
    j = pl.program_id(1)

    # Norm + gate: compute once per row tile (j == 0), reuse for every
    # output-column tile of the same row tile (O axis is innermost).
    @pl.when(j == 0)
    def _():
        x = x_ref[...].astype(jnp.float32)
        g = g_ref[...].astype(jnp.float32)
        var = jnp.mean(x * x, axis=-1, keepdims=True)
        rstd = jax.lax.rsqrt(var + eps)
        y = x * rstd * nw_ref[...].astype(jnp.float32)
        y = y * g * jax.nn.sigmoid(g)            # swish gate
        y_ref[...] = y.astype(y_ref.dtype)       # downcast once for the MXU

    # Linear: (tm, H) @ (H, tn) on the MXU, f32 accumulation.
    acc = jnp.dot(y_ref[...], lw_ref[...], preferred_element_type=jnp.float32)
    acc = acc + lb_ref[...].astype(jnp.float32)
    o_ref[...] = acc.astype(o_ref.dtype)


def fused_rmsnorm_gated_linear(x, g, norm_weight, linear_weight_t, linear_bias,
                               *, eps=1e-5, block_rows=256, block_out=512):
    """Fused RMSNorm + swish gate + linear.

    x, g:            (..., H)
    norm_weight:     (H,)
    linear_weight_t: (H, O)   -- PyTorch weight (O, H) stored PRE-TRANSPOSED,
                                 ideally in bf16 for v6e/v7x MXU throughput.
    linear_bias:     (O,)
    """
    orig_shape = x.shape
    H = x.shape[-1]
    Hw, O = linear_weight_t.shape
    assert Hw == H, "linear_weight_t must be (H, O)"

    x2 = x.reshape(-1, H)
    g2 = g.reshape(-1, H)
    M = x2.shape[0]

    tm, tn = _pick_tiles(M, H, O,
                         x2.dtype.itemsize,
                         linear_weight_t.dtype.itemsize,
                         x.dtype.itemsize,
                         block_rows=block_rows, block_out=block_out)
    M_pad = _round_up(M, tm)
    O_pad = _round_up(O, tn)

    if M_pad != M:
        x2 = jnp.pad(x2, ((0, M_pad - M), (0, 0)))
        g2 = jnp.pad(g2, ((0, M_pad - M), (0, 0)))

    lw = linear_weight_t
    lb = linear_bias.reshape(1, O)
    if O_pad != O:
        lw = jnp.pad(lw, ((0, 0), (0, O_pad - O)))
        lb = jnp.pad(lb, ((0, 0), (0, O_pad - O)))

    nw = norm_weight.reshape(1, H)
    compute_dtype = lw.dtype  # MXU operand dtype (bf16 recommended)

    grid = (M_pad // tm, O_pad // tn)  # O axis innermost ("arbitrary")

    cost = pl.CostEstimate(
        flops=2 * M_pad * H * O_pad,
        transcendentals=M_pad * H,  # sigmoid
        bytes_accessed=(x2.size * x2.dtype.itemsize
                        + g2.size * g2.dtype.itemsize
                        + lw.size * lw.dtype.itemsize
                        + lb.size * lb.dtype.itemsize
                        + nw.size * nw.dtype.itemsize
                        + M_pad * O_pad * x.dtype.itemsize))

    out = pl.pallas_call(
        functools.partial(_fused_rmsnorm_gate_linear_kernel, eps=eps),
        out_shape=jax.ShapeDtypeStruct((M_pad, O_pad), x.dtype),
        grid_spec=pltpu.PrefetchScalarGridSpec(
            num_scalar_prefetch=0,
            grid=grid,
            in_specs=[
                pl.BlockSpec((tm, H), lambda i, j: (i, 0)),   # x rows
                pl.BlockSpec((tm, H), lambda i, j: (i, 0)),   # g rows
                pl.BlockSpec((1, H), lambda i, j: (0, 0)),    # norm weight
                pl.BlockSpec((H, tn), lambda i, j: (0, j)),   # weight^T cols
                pl.BlockSpec((1, tn), lambda i, j: (0, j)),   # bias cols
            ],
            out_specs=pl.BlockSpec((tm, tn), lambda i, j: (i, j)),
            scratch_shapes=[pltpu.VMEM((tm, H), compute_dtype)],
        ),
        compiler_params=pltpu.CompilerParams(
            dimension_semantics=("parallel", "arbitrary"),
            vmem_limit_bytes=64 * 1024 * 1024),
        cost_estimate=cost,
    )(x2, g2, nw, lw, lb)

    out = out[:M, :O]
    return out.reshape(*orig_shape[:-1], O)


def _reference(x, g, norm_weight, linear_weight_t, linear_bias, eps=1e-5):
    xf = x.astype(jnp.float32)
    gf = g.astype(jnp.float32)
    rstd = jax.lax.rsqrt(jnp.mean(xf * xf, axis=-1, keepdims=True) + eps)
    y = xf * rstd * norm_weight.astype(jnp.float32)
    y = y * gf * jax.nn.sigmoid(gf)
    # Matches the module: y is cast to linear_weight.dtype before F.linear.
    y = y.astype(linear_weight_t.dtype)
    out = jnp.dot(y, linear_weight_t, preferred_element_type=jnp.float32)
    out = out + linear_bias.astype(jnp.float32)
    return out.astype(x.dtype)


if __name__ == "__main__":
    batch, seq, hidden, out_features = 2, 8, 128, 256
    eps = 1e-5  # module default

    key = jax.random.PRNGKey(0)
    kx, kg, kw, kb = jax.random.split(key, 4)

    x = jax.random.normal(kx, (batch, seq, hidden), dtype=jnp.float32)
    g = jax.random.normal(kg, (batch, seq, hidden), dtype=jnp.float32)

    # Parameters: RMSNorm weight initialized to ones (reset_parameters),
    # linear weight/bias from fixed PRNG keys.
    norm_weight = jnp.ones((hidden,), dtype=jnp.float32)
    linear_weight = (jax.random.normal(kw, (out_features, hidden),
                                       dtype=jnp.float32)
                     * (1.0 / jnp.sqrt(hidden)))
    linear_bias = jax.random.normal(kb, (out_features,), dtype=jnp.float32) * 0.01

    # Store the linear weight pre-transposed (H, O) in the MXU-friendly dtype
    # (bf16), as a module would at init -- no per-forward transpose.
    linear_weight_t = jnp.transpose(linear_weight).astype(jnp.bfloat16)

    out = fused_rmsnorm_gated_linear(x, g, norm_weight, linear_weight_t,
                                     linear_bias, eps=eps)
    out = jax.block_until_ready(out)

    ref = _reference(x, g, norm_weight, linear_weight_t, linear_bias, eps=eps)
    assert out.shape == (batch, seq, out_features)
    max_err = float(jnp.max(jnp.abs(out - ref)))
    assert jnp.allclose(out, ref, atol=2e-2, rtol=2e-2), f"mismatch: {max_err}"

    print("KERNEL_OK")
</pallas_src>

<mosaic_0001>
module attributes {stable_mosaic.version = 11 : i64} {
  func.func @_fused_rmsnorm_gate_linear_kernel(%arg0: i32, %arg1: i32, %arg2: memref<16x128xf32, #tpu.memory_space<vmem>>, %arg3: memref<16x128xf32, #tpu.memory_space<vmem>>, %arg4: memref<1x128xf32, #tpu.memory_space<vmem>>, %arg5: memref<128x256xbf16, #tpu.memory_space<vmem>>, %arg6: memref<1x256xf32, #tpu.memory_space<vmem>>, %arg7: memref<16x256xf32, #tpu.memory_space<vmem>>, %arg8: memref<16x128xbf16, #tpu.memory_space<vmem>>) attributes {dimension_semantics = [#tpu.dimension_semantics<parallel>, #tpu.dimension_semantics<arbitrary>], iteration_bounds = array<i64: 1, 1>, scalar_prefetch = 0 : i64, scratch_operands = 1 : i64, tpu.core_type = #tpu.core_type<tc>, window_params = [{transform_indices = @transform_0, window_bounds = array<i64: 16, 128>}, {transform_indices = @transform_1, window_bounds = array<i64: 16, 128>}, {pipeline_mode = #tpu.pipeline_mode<synchronous>, transform_indices = @transform_2, window_bounds = array<i64: 1, 128>}, {transform_indices = @transform_3, window_bounds = array<i64: 128, 256>}, {transform_indices = @transform_4, window_bounds = array<i64: 1, 256>}, {transform_indices = @transform_5, window_bounds = array<i64: 16, 256>}]} {
    %c0_i32 = arith.constant 0 : i32
    %0 = arith.cmpi eq, %arg1, %c0_i32 : i32
    %1 = arith.extui %0 : i1 to i32
    %c0_i32_0 = arith.constant 0 : i32
    %2 = arith.cmpi ne, %1, %c0_i32_0 : i32
    scf.if %2 {
      %c0_8 = arith.constant 0 : index
      %c0_9 = arith.constant 0 : index
      %10 = vector.load %arg2[%c0_8, %c0_9] : memref<16x128xf32, #tpu.memory_space<vmem>>, vector<16x128xf32>
      %c0_10 = arith.constant 0 : index
      %c0_11 = arith.constant 0 : index
      %11 = vector.load %arg3[%c0_10, %c0_11] : memref<16x128xf32, #tpu.memory_space<vmem>>, vector<16x128xf32>
      %12 = arith.mulf %10, %10 : vector<16x128xf32>
      %cst_12 = arith.constant dense<0.000000e+00> : vector<16xf32>
      %13 = vector.multi_reduction <add>, %12, %cst_12 [1] : vector<16x128xf32> to vector<16xf32>
      %14 = vector.shape_cast %13 : vector<16xf32> to vector<16x1xf32>
      %cst_13 = arith.constant 1.280000e+02 : f32
      %15 = vector.broadcast %cst_13 : f32 to vector<16x1xf32>
      %16 = arith.divf %14, %15 : vector<16x1xf32>
      %cst_14 = arith.constant 9.99999974E-6 : f32
      %17 = vector.broadcast %cst_14 : f32 to vector<16x1xf32>
      %18 = arith.addf %16, %17 : vector<16x1xf32>
      %19 = math.rsqrt %18 : vector<16x1xf32>
      %20 = vector.broadcast %19 : vector<16x1xf32> to vector<16x128xf32>
      %21 = arith.mulf %10, %20 : vector<16x128xf32>
      %c0_15 = arith.constant 0 : index
      %c0_16 = arith.constant 0 : index
      %22 = vector.load %arg4[%c0_15, %c0_16] : memref<1x128xf32, #tpu.memory_space<vmem>>, vector<1x128xf32>
      %23 = vector.broadcast %22 : vector<1x128xf32> to vector<16x128xf32>
      %24 = arith.mulf %21, %23 : vector<16x128xf32>
      %25 = arith.mulf %24, %11 : vector<16x128xf32>
      %26 = arith.negf %11 : vector<16x128xf32>
      %27 = math.exp %26 : vector<16x128xf32>
      %cst_17 = arith.constant 1.000000e+00 : f32
      %28 = vector.broadcast %cst_17 : f32 to vector<16x128xf32>
      %29 = arith.addf %28, %27 : vector<16x128xf32>
      %30 = arith.divf %28, %29 : vector<16x128xf32>
      %31 = arith.mulf %25, %30 : vector<16x128xf32>
      %32 = arith.truncf %31 : vector<16x128xf32> to vector<16x128xbf16>
      %c0_18 = arith.constant 0 : index
      %c0_19 = arith.constant 0 : index
      %33 = vector.load %arg8[%c0_18, %c0_19] : memref<16x128xbf16, #tpu.memory_space<vmem>>, vector<16x128xbf16>
      tpu.vector_store %arg8[%c0_18, %c0_19], %32 {strides = array<i32>} : memref<16x128xbf16, #tpu.memory_space<vmem>>, vector<16x128xbf16>,
    } else {
    }
    %c0 = arith.constant 0 : index
    %c0_1 = arith.constant 0 : index
    %3 = vector.load %arg8[%c0, %c0_1] : memref<16x128xbf16, #tpu.memory_space<vmem>>, vector<16x128xbf16>
    %c0_2 = arith.constant 0 : index
    %c0_3 = arith.constant 0 : index
    %4 = vector.load %arg5[%c0_2, %c0_3] : memref<128x256xbf16, #tpu.memory_space<vmem>>, vector<128x256xbf16>
    %cst = arith.constant dense<0.000000e+00> : vector<16x256xf32>
    %5 = tpu.matmul %3, %4, %cst {dimension_numbers = #tpu.dot_dimension_numbers<[1], [0], [0], [1], [0, 0, 1, 1], [], []>} : vector<16x128xbf16>, vector<128x256xbf16>, vector<16x256xf32> -> vector<16x256xf32>
    %c0_4 = arith.constant 0 : index
    %c0_5 = arith.constant 0 : index
    %6 = vector.load %arg6[%c0_4, %c0_5] : memref<1x256xf32, #tpu.memory_space<vmem>>, vector<1x256xf32>
    %7 = vector.broadcast %6 : vector<1x256xf32> to vector<16x256xf32>
    %8 = arith.addf %5, %7 : vector<16x256xf32>
    %c0_6 = arith.constant 0 : index
    %c0_7 = arith.constant 0 : index
    %9 = vector.load %arg7[%c0_6, %c0_7] : memref<16x256xf32, #tpu.memory_space<vmem>>, vector<16x256xf32>
    tpu.vector_store %arg7[%c0_6, %c0_7], %8 {strides = array<i32>} : memref<16x256xf32, #tpu.memory_space<vmem>>, vector<16x256xf32>,
    return
  }
  func.func @transform_0(%arg0: i32, %arg1: i32) -> (i32, i32) {
    %c0_i32 = arith.constant 0 : i32
    %c0_i32_0 = arith.constant 0 : i32
    return %arg0, %c0_i32 : i32, i32
  }
  func.func @transform_1(%arg0: i32, %arg1: i32) -> (i32, i32) {
    %c0_i32 = arith.constant 0 : i32
    %c0_i32_0 = arith.constant 0 : i32
    return %arg0, %c0_i32 : i32, i32
  }
  func.func @transform_2(%arg0: i32, %arg1: i32) -> (i32, i32) {
    %c0_i32 = arith.constant 0 : i32
    %c0_i32_0 = arith.constant 0 : i32
    %c0_i32_1 = arith.constant 0 : i32
    return %c0_i32, %c0_i32_0 : i32, i32
  }
  func.func @transform_3(%arg0: i32, %arg1: i32) -> (i32, i32) {
    %c0_i32 = arith.constant 0 : i32
    %c0_i32_0 = arith.constant 0 : i32
    return %c0_i32, %arg1 : i32, i32
  }
  func.func @transform_4(%arg0: i32, %arg1: i32) -> (i32, i32) {
    %c0_i32 = arith.constant 0 : i32
    %c0_i32_0 = arith.constant 0 : i32
    return %c0_i32, %arg1 : i32, i32
  }
  func.func @transform_5(%arg0: i32, %arg1: i32) -> (i32, i32) {
    %c0_i32 = arith.constant 0 : i32
    return %arg0, %arg1 : i32, i32
  }
}

</mosaic_0001>

<llo_original>
// kernel: tpu_custom_call.1
$region0: #{tpu_custom_call.1}
  #allocation0 [shape = 'u32[]', space=smem, size = 0x4, offset = 0x4, fixed_abs, tag = 'smem constant byte address 0x4 - core index']
  #allocation1 [shape = 'u32[144,128]{1,0:T(1,128)}', space=vmem, size = 0x12000, scoped, tag = 'internal scratch']
  #allocation2 [shape = 'bf16[16,128]{1,0:T(8,128)(2,1)}', space=vmem, size = 0x1000, scoped, tag = 'scratch operand']
  %s0 = inlined_call_operand.hbm [shape: f32[16,128], index: 0, kind: input, shape index: {}]
  %s1 = inlined_call_operand.hbm [shape: f32[16,128], index: 1, kind: input, shape index: {}]
  %s2 = inlined_call_operand.vmem [shape: f32[1,128], index: 2, kind: input, shape index: {}]
  %s3 = inlined_call_operand.hbm [shape: bf16[128,256], index: 3, kind: input, shape index: {}]
  %s4 = inlined_call_operand.vmem [shape: f32[1,256], index: 4, kind: input, shape index: {}]
  %s5 = inlined_call_operand.hbm [shape: f32[16,256], index: 5, kind: output, shape index: {}]
  %s6 = sld [smem:[#allocation0]]
  $region46: #{tpu_custom_call.1} parent=0
    _
  %s8 = ssub.s32 1, %s6
  %s9 = scalar_select 0, %s8, %s6
  $region1: #{tpu_custom_call.1} parent=0
    #allocation3 [shape = 'u8[8192]{0}', space=vmem, size = 0x2000, scoped, tag = 'input window, operand 0, single buffered']
    #allocation4 [shape = 's32[1]{0}', space=sflag, size = 0x4, scoped, tag = 'scoped memory for tpu_custom_call.1']
    #allocation5 [shape = 's32[1]{0}', space=sflag, size = 0x4, scoped, tag = 'scoped memory for tpu_custom_call.1']
    #allocation6 [shape = 'u8[8192]{0}', space=vmem, size = 0x2000, scoped, tag = 'input window, operand 1, single buffered']
    #allocation7 [shape = 's32[1]{0}', space=sflag, size = 0x4, scoped, tag = 'scoped memory for tpu_custom_call.1']
    #allocation8 [shape = 'u8[65536]{0}', space=vmem, size = 0x10000, scoped, tag = 'input window, operand 3, single buffered']
    #allocation9 [shape = 'u8[16384]{0}', space=vmem, size = 0x4000, scoped, tag = 'output window, operand 0, single buffered']
    %10 = vsyncpa [#allocation4], 0
    %11 = vsyncpa [#allocation7], 0
    %12 = vsyncpa [#allocation5], 0
    // Predicated region
    $region2: #{tpu_custom_call.1} parent=1 // pred_check
      _
    $region3: #{tpu_custom_call.1} parent=1 // pred_check_branch
      %14 = sbr.rel (0) target = $region5
    $region4: #{tpu_custom_call.1} parent=1 // pred_region
      %s16 = ssub.s32 256, 256
      %17 = vsyncadd [#allocation4], %s16
      %s18 = sshll.u32 [#allocation3], 4
      %s19 = int_to_ptr.vmem [resolvable:$true] %s18
      %24 = dma.hbm_to_vmem [thread:$0]  %s0, 256, %s19, [#allocation4], 128, 128, 8
    $region5: #{tpu_custom_call.1} parent=1 // pred_fallthru
      _
    // Predicated region
    $region6: #{tpu_custom_call.1} parent=1 // pred_check
      _
    $region7: #{tpu_custom_call.1} parent=1 // pred_check_branch
      %26 = sbr.rel (0) target = $region9
    $region8: #{tpu_custom_call.1} parent=1 // pred_region
      %s28 = ssub.s32 256, 256
      %29 = vsyncadd [#allocation7], %s28
      %s30 = sshll.u32 [#allocation6], 4
      %s31 = int_to_ptr.vmem [resolvable:$true] %s30
      %36 = dma.hbm_to_vmem [thread:$0]  %s1, 256, %s31, [#allocation7], 128, 128, 8
    $region9: #{tpu_custom_call.1} parent=1 // pred_fallthru
      _
    // Predicated region
    $region10: #{tpu_custom_call.1} parent=1 // pred_check
      _
    $region11: #{tpu_custom_call.1} parent=1 // pred_check_branch
      %38 = sbr.rel (0) target = $region13
    $region12: #{tpu_custom_call.1} parent=1 // pred_region
      _
    $region13: #{tpu_custom_call.1} parent=1 // pred_fallthru
      _
    // Predicated region
    $region14: #{tpu_custom_call.1} parent=1 // pred_check
      _
    $region15: #{tpu_custom_call.1} parent=1 // pred_check_branch
      %40 = sbr.rel (0) target = $region17
    $region16: #{tpu_custom_call.1} parent=1 // pred_region
      %s42 = ssub.s32 2048, 2048
      %43 = vsyncadd [#allocation7], %s42
      %s44 = sshll.u32 [#allocation8], 4
      %s45 = int_to_ptr.vmem [resolvable:$true] %s44
      %50 = dma.hbm_to_vmem [thread:$0]  %s3, 2048, %s45, [#allocation7], 128, 128, 8
    $region17: #{tpu_custom_call.1} parent=1 // pred_fallthru
      _
    // Predicated region
    $region18: #{tpu_custom_call.1} parent=1 // pred_check
      _
    $region19: #{tpu_custom_call.1} parent=1 // pred_check_branch
      %52 = sbr.rel (0) target = $region21
    $region20: #{tpu_custom_call.1} parent=1 // pred_region
      _
    $region21: #{tpu_custom_call.1} parent=1 // pred_fallthru
      _
    // Predicated region
    $region22: #{tpu_custom_call.1} parent=1 // pred_check
      _
    $region23: #{tpu_custom_call.1} parent=1 // pred_check_branch
      %54 = sbr.rel (0) target = $region25
    $region24: #{tpu_custom_call.1} parent=1 // pred_region
      %55 = dma.done [#allocation4], 256
    $region25: #{tpu_custom_call.1} parent=1 // pred_fallthru
      _
    // Predicated region
    $region26: #{tpu_custom_call.1} parent=1 // pred_check
      _
    $region27: #{tpu_custom_call.1} parent=1 // pred_check_branch
      %57 = sbr.rel (0) target = $region29
    $region28: #{tpu_custom_call.1} parent=1 // pred_region
      %58 = dma.done [#allocation7], 256
    $region29: #{tpu_custom_call.1} parent=1 // pred_fallthru
      _
    // Predicated region
    $region30: #{tpu_custom_call.1} parent=1 // pred_check
      _
    $region31: #{tpu_custom_call.1} parent=1 // pred_check_branch
      %60 = sbr.rel (0) target = $region33
    $region32: #{tpu_custom_call.1} parent=1 // pred_region
      %61 = dma.done [#allocation7], 2048
    $region33: #{tpu_custom_call.1} parent=1 // pred_fallthru
      _
    %p63 = scmp.eq.s32.totalorder 0, 0
    // Predicated region
    $region34: #{tpu_custom_call.1} parent=1 // pred_check
      %p64 = pneg %p63
    $region35: #{tpu_custom_call.1} parent=1 // pred_check_branch
      %66 = sbr.rel (%p64) target = $region37
    $region36: #{tpu_custom_call.1} parent=1 // pred_region
      %v67 = vld [vmem:[#allocation3] sm:$0xff]
      %v68 = vld [vmem:[#allocation3 + $0x8] sm:$0xff]
      %v69 = vld [vmem:[#allocation6] sm:$0xff]
      %v70 = vld [vmem:[#allocation6 + $0x8] sm:$0xff]
      %v71 = vmul.f32 %v67, %v67
      %v72 = vmul.f32 %v68, %v68
      %73 = vadd.xlane.f32.xlu0 %v71
      %v74 = vpop.xlane.xlu0 %73
      %75 = vadd.xlane.f32.xlu0 %v72
      %v76 = vpop.xlane.xlu0 %75
      %v77 = vrcp.pop 128.0
      %v78 = vmul.f32 %v74, %v77
      %v79 = vmul.f32 %v76, %v77
      %v80 = vadd.f32 %v78, 1e-05
      %v81 = vadd.f32 %v79, 1e-05
      %v82 = vrsqrt.pop %v80
      %v83 = vrsqrt.pop %v81
      %v84 = vmul.f32 %v67, %v82
      %v85 = vmul.f32 %v68, %v83
      %v86 = vld [vmem:[%s2] sm:$0x1]
      %v88 = vlaneseq
      %v89 = vshrl.u32 %v88, 7
      %v90 = vsub.s32 0, %v89
      %v91 = vrot.slane %v86, %v90
      %v93 = vmul.f32 %v84, %v91
      %v94 = vmul.f32 %v85, %v91
      %v95 = vmul.f32 %v93, %v69
      %v96 = vmul.f32 %v94, %v70
      %v97 = vxor.u32 %v69, 2147483648
      %v98 = vxor.u32 %v70, 2147483648
      %v99 = vmul.f32 %v97, 1.442695
      %v100 = vpow.pop %v99
      %v101 = vmul.f32 %v98, 1.442695
      %v102 = vpow.pop %v101
      %v103 = vadd.f32 %v100, 1.0
      %v104 = vadd.f32 %v102, 1.0
      %v105 = vrcp.pop %v103
      %v106 = vmul.f32 1.0, %v105
      %v107 = vrcp.pop %v104
      %v108 = vmul.f32 1.0, %v107
      %v109 = vmul.f32 %v95, %v106
      %v110 = vmul.f32 %v96, %v108
      %v111 = vpack.c.bf16 %v110, %v109
      %v113 = vunpack.c.l.b16 %v111
      %v114 = vunpack.c.h.b16 %v111
      %v115 = vpack.c.b16 %v113, %v113
      %v116 = vpack.c.b16 %v114, %v114
      %119 = vst [vmem:[#allocation2] sm:$0xf] %v115
      %120 = vst [vmem:[#allocation2 + $0x4] sm:$0xf] %v116
    $region37: #{tpu_custom_call.1} parent=1 // pred_fallthru
      _
    %v121 = vld [vmem:[#allocation2] sm:$0xf]
    %v122 = vld [vmem:[#allocation2 + $0x4] sm:$0xf]
    %v123 = vld [vmem:[#allocation8] sm:$0xff]
    %v124 = vld [vmem:[#allocation8 + $0x8] sm:$0xff]
    %v125 = vld [vmem:[#allocation8 + $0x10] sm:$0xff]
    %v126 = vld [vmem:[#allocation8 + $0x18] sm:$0xff]
    %v127 = vld [vmem:[#allocation8 + $0x20] sm:$0xff]
    %v128 = vld [vmem:[#allocation8 + $0x28] sm:$0xff]
    %v129 = vld [vmem:[#allocation8 + $0x30] sm:$0xff]
    %v130 = vld [vmem:[#allocation8 + $0x38] sm:$0xff]
    %v131 = vld [vmem:[#allocation8 + $0x40] sm:$0xff]
    %v132 = vld [vmem:[#allocation8 + $0x48] sm:$0xff]
    %v133 = vld [vmem:[#allocation8 + $0x50] sm:$0xff]
    %v134 = vld [vmem:[#allocation8 + $0x58] sm:$0xff]
    %v135 = vld [vmem:[#allocation8 + $0x60] sm:$0xff]
    %v136 = vld [vmem:[#allocation8 + $0x68] sm:$0xff]
    %v137 = vld [vmem:[#allocation8 + $0x70] sm:$0xff]
    %v138 = vld [vmem:[#allocation8 + $0x78] sm:$0xff]
    %v139 = vld [vmem:[%s4] sm:$0x3]
    %v141 = vlaneseq
    %v142 = vshrl.u32 %v141, 7
    %v143 = vsub.s32 0, %v142
    %v144 = vrot.slane %v139, %v143
    %v145 = vlaneseq
    %v146 = vshrl.u32 %v145, 7
    %v147 = vsub.s32 1, %v146
    %v148 = vrot.slane %v139, %v147
    %v153 = vunpack.c.l.b16 %v121
    %v154 = vunpack.c.l.b16 %v122
    %v155 = vpack.c.b16 %v154, %v153
    %v173 = vunpack.c.l.b16 %v123
    %v174 = vunpack.c.h.b16 %v123
    %v175 = vunpack.c.l.b16 %v124
    %v176 = vunpack.c.h.b16 %v124
    %v177 = vunpack.c.l.b16 %v125
    %v178 = vunpack.c.h.b16 %v125
    %v179 = vunpack.c.l.b16 %v126
    %v180 = vunpack.c.h.b16 %v126
    %v181 = vunpack.c.l.b16 %v127
    %v182 = vunpack.c.h.b16 %v127
    %v183 = vunpack.c.l.b16 %v128
    %v184 = vunpack.c.h.b16 %v128
    %v185 = vunpack.c.l.b16 %v129
    %v186 = vunpack.c.h.b16 %v129
    %v187 = vunpack.c.l.b16 %v130
    %v188 = vunpack.c.h.b16 %v130
    %v189 = vunpack.c.l.b16 %v131
    %v190 = vunpack.c.h.b16 %v131
    %v191 = vunpack.c.l.b16 %v132
    %v192 = vunpack.c.h.b16 %v132
    %v193 = vunpack.c.l.b16 %v133
    %v194 = vunpack.c.h.b16 %v133
    %v195 = vunpack.c.l.b16 %v134
    %v196 = vunpack.c.h.b16 %v134
    %v197 = vunpack.c.l.b16 %v135
    %v198 = vunpack.c.h.b16 %v135
    %v199 = vunpack.c.l.b16 %v136
    %v200 = vunpack.c.h.b16 %v136
    %v201 = vunpack.c.l.b16 %v137
    %v202 = vunpack.c.h.b16 %v137
    %v203 = vunpack.c.l.b16 %v138
    %v204 = vunpack.c.h.b16 %v138
    %v205 = vpack.c.b16 %v175, %v173
    %v206 = vpack.c.b16 %v176, %v174
    %v207 = vpack.c.b16 %v179, %v177
    %v208 = vpack.c.b16 %v180, %v178
    %v209 = vpack.c.b16 %v183, %v181
    %v210 = vpack.c.b16 %v184, %v182
    %v211 = vpack.c.b16 %v187, %v185
    %v212 = vpack.c.b16 %v188, %v186
    %v213 = vpack.c.b16 %v191, %v189
    %v214 = vpack.c.b16 %v192, %v190
    %v215 = vpack.c.b16 %v195, %v193
    %v216 = vpack.c.b16 %v196, %v194
    %v217 = vpack.c.b16 %v199, %v197
    %v218 = vpack.c.b16 %v200, %v198
    %v219 = vpack.c.b16 %v203, %v201
    %v220 = vpack.c.b16 %v204, %v202
    %237 = vmatprep.subr.bf16.mxu0 %v220
    %238 = vmatpush1.bf16.msra.mxu0 %v219
    %239 = vmatprep.subr.bf16.mxu0 %v218
    %240 = vmatpush1.bf16.msra.mxu0 %v217
    %241 = vmatprep.subr.bf16.mxu0 %v216
    %242 = vmatpush1.bf16.msra.mxu0 %v215
    %243 = vmatprep.subr.bf16.mxu0 %v214
    %244 = vmatpush1.bf16.msra.mxu0 %v213
    %245 = vmatprep.subr.bf16.mxu0 %v212
    %246 = vmatpush1.bf16.msra.mxu0 %v211
    %247 = vmatprep.subr.bf16.mxu0 %v210
    %248 = vmatpush1.bf16.msra.mxu0 %v209
    %249 = vmatprep.subr.bf16.mxu0 %v208
    %250 = vmatpush1.bf16.msra.mxu0 %v207
    %251 = vmatprep.subr.bf16.mxu0 %v206
    %252 = vmatpush1.bf16.msra.mxu0 %v205
    %253 = vmatprep.subr.bf16.mxu0 0
    %254 = vmatpush2.bf16.msra.mxu0 0
    %255 = vmatprep.subr.bf16.mxu0 0
    %256 = vmatpush2.bf16.msra.mxu0 0
    %257 = vmatprep.subr.bf16.mxu0 0
    %258 = vmatpush2.bf16.msra.mxu0 0
    %259 = vmatprep.subr.bf16.mxu0 0
    %260 = vmatpush2.bf16.msra.mxu0 0
    %261 = vmatprep.subr.bf16.mxu0 0
    %262 = vmatpush2.bf16.msra.mxu0 0
    %263 = vmatprep.subr.bf16.mxu0 0
    %264 = vmatpush2.bf16.msra.mxu0 0
    %265 = vmatprep.subr.bf16.mxu0 0
    %266 = vmatpush2.bf16.msra.mxu0 0
    %267 = vmatprep.subr.bf16.mxu0 0
    %268 = vmatpush2.bf16.msra.mxu0 0
    %269 = vmatprep.mubr.bf16.mxu0 0
    %270 = vmatmul.mubr.bf16.gmra.mxu0 %v155
    %v271 = vpop.f32.mrf.mxu0
    %v272 = vadd.f32 %v144, %v271
    %v273 = vpop.f32.mrf.mxu0
    %v274 = vadd.f32 %v148, %v273
    %v275 = vpop.f32.mrf.mxu0
    %v276 = vadd.f32 %v144, %v275
    %v277 = vpop.f32.mrf.mxu0
    %v278 = vadd.f32 %v148, %v277
    %279 = vdwg.mxu0
    %280 = vst [vmem:[#allocation9] sm:$0xff] %v272
    %281 = vst [vmem:[#allocation9 + $0x8] sm:$0xff] %v274
    %282 = vst [vmem:[#allocation9 + $0x10] sm:$0xff] %v276
    %283 = vst [vmem:[#allocation9 + $0x18] sm:$0xff] %v278
    // Predicated region
    $region38: #{tpu_custom_call.1} parent=1 // pred_check
      _
    $region39: #{tpu_custom_call.1} parent=1 // pred_check_branch
      %285 = sbr.rel (0) target = $region41
    $region40: #{tpu_custom_call.1} parent=1 // pred_region
      %s287 = ssub.s32 512, 512
      %288 = vsyncadd [#allocation5], %s287
      %s289 = sshll.u32 [#allocation9], 4
      %s290 = int_to_ptr.vmem [resolvable:$true] %s289
      %295 = dma.vmem_to_hbm [thread:$0]  %s290, 512, %s5, [#allocation5], 256, 256, 16
    $region41: #{tpu_custom_call.1} parent=1 // pred_fallthru
      _
    // Predicated region
    $region42: #{tpu_custom_call.1} parent=1 // pred_check
      _
    $region43: #{tpu_custom_call.1} parent=1 // pred_check_branch
      %297 = sbr.rel (0) target = $region45
    $region44: #{tpu_custom_call.1} parent=1 // pred_region
      %298 = dma.done [#allocation5], 512
    $region45: #{tpu_custom_call.1} parent=1 // pred_fallthru
      _
    %299 = vsyncpa [#allocation4], 1
    %300 = vsyncpa [#allocation7], 1
    %301 = vsyncpa [#allocation5], 1

</llo_original>
